<compile_context>
chip_gen: v5e
topology: v5e:2x2
jax: 0.10.0
libtpu: 0.0.40
codegen_flags: <defaults>
</compile_context>

<pallas_src>
import functools
import math

import numpy as np
import jax
import jax.numpy as jnp
from jax.experimental import pallas as pl
from jax.experimental.pallas import tpu as pltpu


# -----------------------------------------------------------------------------
# Compiler params helper (per-generation VMEM budget).
# -----------------------------------------------------------------------------
@functools.lru_cache(maxsize=None)
def _vmem_limit_bytes():
    try:
        cap = int(pltpu.get_tpu_info().vmem_capacity_bytes)
    except Exception:
        return None  # fall back to the compiler default scoped limit
    # ~60% of physical VMEM, clamped: v7x(64MiB)->38MiB, v5e/v6e(128MiB)->76MiB.
    return min(100 * 2**20, max(32 * 2**20, (3 * cap) // 5))


def _compiler_params(dimension_semantics):
    return pltpu.CompilerParams(dimension_semantics=dimension_semantics,
                                vmem_limit_bytes=_vmem_limit_bytes())


# -----------------------------------------------------------------------------
# Bicubic interpolation matrix (PyTorch F.interpolate mode='bicubic',
# align_corners=False, antialias=False; A=-0.75 kernel, src=(dst+0.5)*s-0.5,
# indices clamped).  Pure trace-time numpy glue.
# -----------------------------------------------------------------------------
def bicubic_matrix(in_size: int, out_size: int, A: float = -0.75) -> jnp.ndarray:
    def c1(x):  # |x| <= 1
        return ((A + 2.0) * x - (A + 3.0)) * x * x + 1.0

    def c2(x):  # 1 < |x| < 2
        return ((A * x - 5.0 * A) * x + 8.0 * A) * x - 4.0 * A

    scale = in_size / out_size
    M = np.zeros((out_size, in_size), dtype=np.float32)
    for j in range(out_size):
        src = (j + 0.5) * scale - 0.5
        i0 = int(np.floor(src))
        t = src - i0
        ws = [c2(t + 1.0), c1(t), c1(1.0 - t), c2(2.0 - t)]
        for k in range(4):
            idx = min(max(i0 - 1 + k, 0), in_size - 1)
            M[j, idx] += ws[k]
    return jnp.asarray(M)


# -----------------------------------------------------------------------------
# Pallas kernel 1: separable bicubic resize, one grid step per batch element.
# The W-contraction is done for all channels in a single lane-dense matmul.
# -----------------------------------------------------------------------------
def _resize_kernel(x_ref, mh_ref, mwt_ref, out_ref):
    # x_ref: (1, C, H, W), mh_ref: (rh, H), mwt_ref: (W, rw), out: (1, C, rh, rw)
    C, H, W = x_ref.shape[1], x_ref.shape[2], x_ref.shape[3]
    # Column pass for all channels at once: (C*H, W) @ (W, rw)
    t = jnp.dot(x_ref[0].reshape(C * H, W), mwt_ref[...],
                preferred_element_type=jnp.float32)
    # Row pass per channel: (rh, H) @ (H, rw)
    for c in range(C):
        out_ref[0, c] = jnp.dot(mh_ref[...], t[c * H:(c + 1) * H],
                                preferred_element_type=jnp.float32
                                ).astype(out_ref.dtype)


def bicubic_resize(x_nchw, rh, rw):
    B, C, H, W = x_nchw.shape
    Mh = bicubic_matrix(H, rh)
    MwT = bicubic_matrix(W, rw).T  # (W, rw)
    return pl.pallas_call(
        _resize_kernel,
        out_shape=jax.ShapeDtypeStruct((B, C, rh, rw), x_nchw.dtype),
        grid=(B,),
        in_specs=[
            pl.BlockSpec((1, C, H, W), lambda b: (b, 0, 0, 0)),
            pl.BlockSpec((rh, H), lambda b: (0, 0)),
            pl.BlockSpec((W, rw), lambda b: (0, 0)),
        ],
        out_specs=pl.BlockSpec((1, C, rh, rw), lambda b: (b, 0, 0, 0)),
        compiler_params=_compiler_params(("parallel",)),
    )(x_nchw, Mh, MwT)


# -----------------------------------------------------------------------------
# In-kernel 3x3 conv helper: 9 shifted-tap MXU matmuls on a row-halo'd tile.
#   xpad: (H+2, W, Cin) f32 (rows y-1 .. y+H), zero / neighbour halo included.
#   w9:   (9, Cin, Cout) bf16, bias_row: (1, Cout) f32.
# Horizontal taps are built with pltpu.roll on the flattened (H*W, Cin) band
# (XLU slot, no misaligned sublane slice copies); the wrapped / out-of-image
# columns are masked to zero, which reproduces the SAME padding exactly.
# -----------------------------------------------------------------------------
def _taps_accumulate(xpad, w9, bias_row, *, relu):
    Hp2, W, Cin = xpad.shape
    H = Hp2 - 2
    n = H * W
    Cout = w9.shape[-1]

    col = jax.lax.broadcasted_iota(jnp.int32, (H, W, Cin), 1).reshape(n, Cin)
    not_first = col > 0            # column x-1 exists
    not_last = col < (W - 1)       # column x+1 exists

    # Accumulator initialised directly with the broadcast bias (saves a pass).
    acc = jnp.broadcast_to(bias_row.astype(jnp.float32), (n, Cout))

    for ky in range(3):
        band = xpad[ky:ky + H].reshape(n, Cin).astype(jnp.bfloat16)
        prev_tap = jnp.where(not_first, pltpu.roll(band, shift=1, axis=0), 0.0)
        next_tap = jnp.where(not_last, pltpu.roll(band, shift=n - 1, axis=0), 0.0)
        for kx, tap in enumerate((prev_tap, band, next_tap)):
            acc = acc + jnp.dot(tap, w9[ky * 3 + kx],
                                preferred_element_type=jnp.float32)
    if relu:
        acc = jnp.maximum(acc, 0.0)
    return acc  # (H*W, Cout) f32


def _conv3x3_full(x_hwc, w9, bias_row, *, relu):
    """3x3 SAME conv on a full (H, W, Cin) tile (zero row halo built in VMEM)."""
    H, W, Cin = x_hwc.shape
    zrow = jnp.zeros((1, W, Cin), x_hwc.dtype)
    xpad = jnp.concatenate([zrow, x_hwc, zrow], axis=0)
    return _taps_accumulate(xpad, w9, bias_row, relu=relu)


# -----------------------------------------------------------------------------
# Pallas kernel 2: spatially / Cout-tiled 3x3 conv (large resolutions).
# Grid = (batch, row-tile, cout-tile).  The 1-row top/bottom halos come from
# two extra views of the same HBM array (masked to zero at image borders), so
# no padded activation copy is ever materialised in HBM.
# -----------------------------------------------------------------------------
def _conv3x3_tiled_kernel(x_ref, top_ref, bot_ref, w_ref, b_ref, *rest,
                          n_res, relu):
    res_refs = rest[:n_res]
    out_ref = rest[n_res]

    r = pl.program_id(1)
    last = pl.num_programs(1) - 1

    x = x_ref[0]                                            # (TH, W, Cin)
    TH, W, _ = x.shape
    TC = w_ref.shape[-1]

    top = top_ref[0] * jnp.where(r == 0, 0.0, 1.0)          # (1, W, Cin)
    bot = bot_ref[0] * jnp.where(r == last, 0.0, 1.0)
    xpad = jnp.concatenate([top, x, bot], axis=0)           # (TH+2, W, Cin)

    acc = _taps_accumulate(xpad, w_ref[...], b_ref[...], relu=relu)  # (TH*W, TC)
    for rref in res_refs:                                   # fused residual adds
        acc = acc + rref[0].reshape(TH * W, TC)
    out_ref[0] = acc.reshape(TH, W, TC).astype(out_ref.dtype)


def conv3x3_tiled(x_nhwc, w9_bf16, b_row, residuals=(), relu=False,
                  tile_h=16, tile_c=128):
    """x: [B,H,W,Cin] f32; w9: [9,Cin,Cout] bf16; b_row: [1,Cout] f32."""
    B, H, W, Cin = x_nhwc.shape
    Cout = w9_bf16.shape[-1]
    TH = max(math.gcd(H, tile_h), 1)
    TC = tile_c if (Cout >= tile_c and Cout % tile_c == 0) else Cout
    n_res = len(residuals)
    grid = (B, H // TH, Cout // TC)

    kern = functools.partial(_conv3x3_tiled_kernel, n_res=n_res, relu=relu)
    in_specs = [
        pl.BlockSpec((1, TH, W, Cin), lambda b, r, c: (b, r, 0, 0)),
        pl.BlockSpec((1, 1, W, Cin),
                     lambda b, r, c: (b, jnp.maximum(r * TH - 1, 0), 0, 0)),
        pl.BlockSpec((1, 1, W, Cin),
                     lambda b, r, c: (b, jnp.minimum((r + 1) * TH, H - 1), 0, 0)),
        pl.BlockSpec((9, Cin, TC), lambda b, r, c: (0, 0, c)),
        pl.BlockSpec((1, TC), lambda b, r, c: (0, c)),
    ] + [pl.BlockSpec((1, TH, W, TC), lambda b, r, c: (b, r, 0, c))
         for _ in range(n_res)]

    return pl.pallas_call(
        kern,
        out_shape=jax.ShapeDtypeStruct((B, H, W, Cout), jnp.float32),
        grid=grid,
        in_specs=in_specs,
        out_specs=pl.BlockSpec((1, TH, W, TC), lambda b, r, c: (b, r, 0, c)),
        compiler_params=_compiler_params(("parallel", "parallel", "parallel")),
    )(x_nhwc, x_nhwc, x_nhwc, w9_bf16, b_row, *residuals)


# -----------------------------------------------------------------------------
# Pallas kernel 3: fused conv chain (proj + all residual blocks) for small
# resolutions.  All intermediate activations stay in VMEM — only x_down, the
# weights and the final feature map touch HBM.
# -----------------------------------------------------------------------------
def _fused_chain_kernel(x_ref, pw_ref, pb_ref, rw_ref, rb_ref, out_ref,
                        *, num_blocks):
    R = x_ref.shape[1]
    C = pw_ref.shape[-1]

    xd = x_ref[0]                                            # (R, R, Cin) f32
    xp = _conv3x3_full(xd, pw_ref[...], pb_ref[...], relu=False)  # (R*R, C)
    h = xp
    for i in range(num_blocks):
        t = _conv3x3_full(h.reshape(R, R, C), rw_ref[2 * i], rb_ref[2 * i],
                          relu=True)
        h = h + _conv3x3_full(t.reshape(R, R, C), rw_ref[2 * i + 1],
                              rb_ref[2 * i + 1], relu=False)
    out_ref[0] = (xp + h).reshape(R, R, C).astype(out_ref.dtype)


def fused_conv_chain(x_down_nhwc, params):
    B, R, _, Cin = x_down_nhwc.shape
    C = params["proj_w"].shape[-1]
    nblk = params["res_w"].shape[0] // 2
    kern = functools.partial(_fused_chain_kernel, num_blocks=nblk)
    return pl.pallas_call(
        kern,
        out_shape=jax.ShapeDtypeStruct((B, R, R, C), jnp.float32),
        grid=(B,),
        in_specs=[
            pl.BlockSpec((1, R, R, Cin), lambda b: (b, 0, 0, 0)),
            pl.BlockSpec((9, Cin, C), lambda b: (0, 0, 0)),
            pl.BlockSpec((1, C), lambda b: (0, 0)),
            pl.BlockSpec((2 * nblk, 9, C, C), lambda b: (0, 0, 0, 0)),
            pl.BlockSpec((2 * nblk, 1, C), lambda b: (0, 0, 0)),
        ],
        out_specs=pl.BlockSpec((1, R, R, C), lambda b: (b, 0, 0, 0)),
        compiler_params=_compiler_params(("parallel",)),
    )(x_down_nhwc, params["proj_w"], params["proj_b"],
      params["res_w"], params["res_b"])


# -----------------------------------------------------------------------------
# Parameters (deterministic; Cout zero-padded to a multiple of the lane tile
# so every MXU matmul / store is lane-dense; weights stored bf16, biases f32).
# -----------------------------------------------------------------------------
def init_params(key, in_channels, out_channels, num_resblocks, cout_tile=128):
    def conv_init(k, cin, cout):
        kw, kb = jax.random.split(k)
        fan_in = cin * 9
        w = jax.random.normal(kw, (3, 3, cin, cout), jnp.float32) / np.sqrt(fan_in)
        b = jax.random.normal(kb, (cout,), jnp.float32) * 0.01
        return w, b

    C = out_channels
    Cp = C if C <= cout_tile else cout_tile * (-(-C // cout_tile))
    pad_c = Cp - C

    keys = jax.random.split(key, 1 + 2 * num_resblocks)
    pw, pb = conv_init(keys[0], in_channels, C)
    pw = jnp.pad(pw, ((0, 0), (0, 0), (0, 0), (0, pad_c)))
    pb = jnp.pad(pb, ((0, pad_c),))

    res_w, res_b = [], []
    for i in range(num_resblocks):
        w1, b1 = conv_init(keys[1 + 2 * i], C, C)
        w2, b2 = conv_init(keys[2 + 2 * i], C, C)
        for w, b in ((w1, b1), (w2, b2)):
            wp = jnp.pad(w, ((0, 0), (0, 0), (0, pad_c), (0, pad_c)))
            bp = jnp.pad(b, ((0, pad_c),))
            res_w.append(wp.reshape(9, Cp, Cp))
            res_b.append(bp.reshape(1, Cp))

    return {
        "proj_w": pw.reshape(9, in_channels, Cp).astype(jnp.bfloat16),
        "proj_b": pb.reshape(1, Cp),
        "res_w": jnp.stack(res_w).astype(jnp.bfloat16),   # (2*nblk, 9, Cp, Cp)
        "res_b": jnp.stack(res_b),                        # (2*nblk, 1, Cp)
        "c_real": C,
        "c_pad": Cp,
    }


# -----------------------------------------------------------------------------
# Full forward pass.
# -----------------------------------------------------------------------------
def wavelet_bicubic_residual_encoder(x_nchw, params, multiscale_sizes,
                                     fuse_max_res=32, tile_h=16, tile_c=128):
    c_real = params["c_real"]
    nblk = params["res_w"].shape[0] // 2
    struct_cond = {}
    for res in multiscale_sizes:
        xd = bicubic_resize(x_nchw, res, res)              # [B, Cin, r, r]
        xd = jnp.transpose(xd, (0, 2, 3, 1))               # NHWC (tiny, XLA glue)

        if res <= fuse_max_res:
            # whole conv chain fused into one kernel: activations never hit HBM
            h = fused_conv_chain(xd, params)
        else:
            # large resolutions: row + Cout tiled convs, residual adds fused
            xp = conv3x3_tiled(xd, params["proj_w"], params["proj_b"],
                               relu=False, tile_h=tile_h, tile_c=tile_c)
            h = xp
            for i in range(nblk):
                w1, b1 = params["res_w"][2 * i], params["res_b"][2 * i]
                w2, b2 = params["res_w"][2 * i + 1], params["res_b"][2 * i + 1]
                t = conv3x3_tiled(h, w1, b1, relu=True,
                                  tile_h=tile_h, tile_c=tile_c)
                resids = (h, xp) if i == nblk - 1 else (h,)
                h = conv3x3_tiled(t, w2, b2, residuals=resids, relu=False,
                                  tile_h=tile_h, tile_c=tile_c)

        feat = jnp.transpose(h, (0, 3, 1, 2))              # back to NCHW
        struct_cond[str(res)] = feat[:, :c_real]
    return struct_cond


# -----------------------------------------------------------------------------
# Pure-JAX reference (f32 activations, HIGHEST precision) for correctness.
# Uses the same (bf16-rounded) weights as the kernels, so the comparison only
# measures the kernel's bf16-patch / f32-accumulate MXU path.
# -----------------------------------------------------------------------------
def _ref_conv(x, w_hwio, b):
    y = jax.lax.conv_general_dilated(
        x, w_hwio, window_strides=(1, 1), padding="SAME",
        dimension_numbers=("NHWC", "HWIO", "NHWC"),
        precision=jax.lax.Precision.HIGHEST)
    return y + b[None, None, None, :]


def reference_forward(x_nchw, params, multiscale_sizes):
    B, Cin, H, W = x_nchw.shape
    C = params["c_pad"]
    c_real = params["c_real"]
    nblk = params["res_w"].shape[0] // 2

    pw = params["proj_w"].astype(jnp.float32).reshape(3, 3, Cin, C)
    pb = params["proj_b"].astype(jnp.float32).reshape(C)
    rws = [params["res_w"][k].astype(jnp.float32).reshape(3, 3, C, C)
           for k in range(2 * nblk)]
    rbs = [params["res_b"][k].astype(jnp.float32).reshape(C)
           for k in range(2 * nblk)]

    out = {}
    for res in multiscale_sizes:
        Mh = bicubic_matrix(H, res)
        Mw = bicubic_matrix(W, res)
        xd = jnp.einsum("oh,bchw,pw->bcop", Mh, x_nchw, Mw,
                        precision=jax.lax.Precision.HIGHEST)
        xd = jnp.transpose(xd, (0, 2, 3, 1))
        xp = _ref_conv(xd, pw, pb)
        h = xp
        for i in range(nblk):
            t = jax.nn.relu(_ref_conv(h, rws[2 * i], rbs[2 * i]))
            h = h + _ref_conv(t, rws[2 * i + 1], rbs[2 * i + 1])
        out[str(res)] = jnp.transpose(xp + h, (0, 3, 1, 2))[:, :c_real]
    return out


if __name__ == "__main__":
    B, Cin, H, W = 2, 4, 16, 16
    Cout = 32                      # scaled-down stand-in for 320
    num_resblocks = 3
    multiscale_sizes = (16, 8)     # scaled-down stand-in for (128, 64, 32, 16, 8)

    key = jax.random.PRNGKey(0)
    kx, kp, kt = jax.random.split(key, 3)
    x = jax.random.normal(kx, (B, Cin, H, W), jnp.float32)
    params = init_params(kp, Cin, Cout, num_resblocks)

    outs = jax.block_until_ready(
        wavelet_bicubic_residual_encoder(x, params, multiscale_sizes))
    refs = reference_forward(x, params, multiscale_sizes)
    for r in multiscale_sizes:
        k = str(r)
        assert outs[k].shape == (B, Cout, r, r), outs[k].shape
        # Tolerance covers the bf16 MXU fast path (activations are quantised
        # to bf16 before each of the 7 chained matmuls; accumulation is f32).
        np.testing.assert_allclose(np.asarray(outs[k]), np.asarray(refs[k]),
                                   rtol=3e-2, atol=3e-2)

    # Extra unit check: exercise the row/Cout-tiled conv path (used for the
    # large production resolutions) incl. row halos, cout grid axis, fused
    # bias + ReLU + residual add.
    k1, k2, k3, k4 = jax.random.split(kt, 4)
    xt = jax.random.normal(k1, (2, 16, 16, 8), jnp.float32)
    wt = jax.random.normal(k2, (3, 3, 8, 256), jnp.float32) / np.sqrt(72.0)
    bt = jax.random.normal(k3, (256,), jnp.float32) * 0.01
    rt = jax.random.normal(k4, (2, 16, 16, 256), jnp.float32)
    w9 = wt.astype(jnp.bfloat16).reshape(9, 8, 256)
    got = jax.block_until_ready(
        conv3x3_tiled(xt, w9, bt.reshape(1, 256), residuals=(rt,), relu=True,
                      tile_h=8, tile_c=128))
    want = jax.nn.relu(
        _ref_conv(xt, w9.astype(jnp.float32).reshape(3, 3, 8, 256), bt)) + rt
    np.testing.assert_allclose(np.asarray(got), np.asarray(want),
                               rtol=1e-2, atol=1e-2)

    print("KERNEL_OK")
</pallas_src>

<mosaic_0001>
module attributes {stable_mosaic.version = 11 : i64} {
  func.func @_resize_kernel(%arg0: i32, %arg1: memref<1x4x16x16xf32, #tpu.memory_space<vmem>>, %arg2: memref<16x16xf32, #tpu.memory_space<vmem>>, %arg3: memref<16x16xf32, #tpu.memory_space<vmem>>, %arg4: memref<1x4x16x16xf32, #tpu.memory_space<vmem>>) attributes {dimension_semantics = [#tpu.dimension_semantics<parallel>], iteration_bounds = array<i64: 2>, scalar_prefetch = 0 : i64, scratch_operands = 0 : i64, tpu.core_type = #tpu.core_type<tc>, window_params = [{transform_indices = @transform_0, window_bounds = array<i64: 1, 4, 16, 16>}, {pipeline_mode = #tpu.pipeline_mode<synchronous>, transform_indices = @transform_1, window_bounds = array<i64: 16, 16>}, {pipeline_mode = #tpu.pipeline_mode<synchronous>, transform_indices = @transform_2, window_bounds = array<i64: 16, 16>}, {transform_indices = @transform_3, window_bounds = array<i64: 1, 4, 16, 16>}]} {
    %c0 = arith.constant 0 : index
    %c0_0 = arith.constant 0 : index
    %c0_1 = arith.constant 0 : index
    %c0_2 = arith.constant 0 : index
    %0 = vector.load %arg1[%c0, %c0_0, %c0_1, %c0_2] : memref<1x4x16x16xf32, #tpu.memory_space<vmem>>, vector<1x4x16x16xf32>
    %1 = vector.shape_cast %0 : vector<1x4x16x16xf32> to vector<4x16x16xf32>
    %2 = vector.shape_cast %1 : vector<4x16x16xf32> to vector<64x16xf32>
    %c0_3 = arith.constant 0 : index
    %c0_4 = arith.constant 0 : index
    %3 = vector.load %arg3[%c0_3, %c0_4] : memref<16x16xf32, #tpu.memory_space<vmem>>, vector<16x16xf32>
    %cst = arith.constant dense<0.000000e+00> : vector<64x16xf32>
    %4 = tpu.matmul %2, %3, %cst {dimension_numbers = #tpu.dot_dimension_numbers<[1], [0], [0], [1], [0, 0, 1, 1], [], []>} : vector<64x16xf32>, vector<16x16xf32>, vector<64x16xf32> -> vector<64x16xf32>
    %c0_5 = arith.constant 0 : index
    %c0_6 = arith.constant 0 : index
    %5 = vector.load %arg2[%c0_5, %c0_6] : memref<16x16xf32, #tpu.memory_space<vmem>>, vector<16x16xf32>
    %6 = vector.extract_strided_slice %4 {offsets = [0, 0], sizes = [16, 16], strides = [1, 1]} : vector<64x16xf32> to vector<16x16xf32>
    %cst_7 = arith.constant dense<0.000000e+00> : vector<16x16xf32>
    %7 = tpu.matmul %5, %6, %cst_7 {dimension_numbers = #tpu.dot_dimension_numbers<[1], [0], [0], [1], [0, 0, 1, 1], [], []>} : vector<16x16xf32>, vector<16x16xf32>, vector<16x16xf32> -> vector<16x16xf32>
    %c0_8 = arith.constant 0 : index
    %c0_9 = arith.constant 0 : index
    %c0_10 = arith.constant 0 : index
    %c0_11 = arith.constant 0 : index
    %8 = vector.load %arg4[%c0_8, %c0_9, %c0_10, %c0_11] : memref<1x4x16x16xf32, #tpu.memory_space<vmem>>, vector<1x1x16x16xf32>
    %9 = vector.shape_cast %8 : vector<1x1x16x16xf32> to vector<16x16xf32>
    %10 = vector.shape_cast %7 : vector<16x16xf32> to vector<1x1x16x16xf32>
    tpu.vector_store %arg4[%c0_8, %c0_9, %c0_10, %c0_11], %10 {strides = array<i32>} : memref<1x4x16x16xf32, #tpu.memory_space<vmem>>, vector<1x1x16x16xf32>,
    %c0_12 = arith.constant 0 : index
    %c0_13 = arith.constant 0 : index
    %11 = vector.load %arg2[%c0_12, %c0_13] : memref<16x16xf32, #tpu.memory_space<vmem>>, vector<16x16xf32>
    %12 = vector.extract_strided_slice %4 {offsets = [16, 0], sizes = [16, 16], strides = [1, 1]} : vector<64x16xf32> to vector<16x16xf32>
    %cst_14 = arith.constant dense<0.000000e+00> : vector<16x16xf32>
    %13 = tpu.matmul %11, %12, %cst_14 {dimension_numbers = #tpu.dot_dimension_numbers<[1], [0], [0], [1], [0, 0, 1, 1], [], []>} : vector<16x16xf32>, vector<16x16xf32>, vector<16x16xf32> -> vector<16x16xf32>
    %c0_15 = arith.constant 0 : index
    %c1 = arith.constant 1 : index
    %c0_16 = arith.constant 0 : index
    %c0_17 = arith.constant 0 : index
    %14 = vector.load %arg4[%c0_15, %c1, %c0_16, %c0_17] : memref<1x4x16x16xf32, #tpu.memory_space<vmem>>, vector<1x1x16x16xf32>
    %15 = vector.shape_cast %14 : vector<1x1x16x16xf32> to vector<16x16xf32>
    %16 = vector.shape_cast %13 : vector<16x16xf32> to vector<1x1x16x16xf32>
    tpu.vector_store %arg4[%c0_15, %c1, %c0_16, %c0_17], %16 {strides = array<i32>} : memref<1x4x16x16xf32, #tpu.memory_space<vmem>>, vector<1x1x16x16xf32>,
    %c0_18 = arith.constant 0 : index
    %c0_19 = arith.constant 0 : index
    %17 = vector.load %arg2[%c0_18, %c0_19] : memref<16x16xf32, #tpu.memory_space<vmem>>, vector<16x16xf32>
    %18 = vector.extract_strided_slice %4 {offsets = [32, 0], sizes = [16, 16], strides = [1, 1]} : vector<64x16xf32> to vector<16x16xf32>
    %cst_20 = arith.constant dense<0.000000e+00> : vector<16x16xf32>
    %19 = tpu.matmul %17, %18, %cst_20 {dimension_numbers = #tpu.dot_dimension_numbers<[1], [0], [0], [1], [0, 0, 1, 1], [], []>} : vector<16x16xf32>, vector<16x16xf32>, vector<16x16xf32> -> vector<16x16xf32>
    %c0_21 = arith.constant 0 : index
    %c2 = arith.constant 2 : index
    %c0_22 = arith.constant 0 : index
    %c0_23 = arith.constant 0 : index
    %20 = vector.load %arg4[%c0_21, %c2, %c0_22, %c0_23] : memref<1x4x16x16xf32, #tpu.memory_space<vmem>>, vector<1x1x16x16xf32>
    %21 = vector.shape_cast %20 : vector<1x1x16x16xf32> to vector<16x16xf32>
    %22 = vector.shape_cast %19 : vector<16x16xf32> to vector<1x1x16x16xf32>
    tpu.vector_store %arg4[%c0_21, %c2, %c0_22, %c0_23], %22 {strides = array<i32>} : memref<1x4x16x16xf32, #tpu.memory_space<vmem>>, vector<1x1x16x16xf32>,
    %c0_24 = arith.constant 0 : index
    %c0_25 = arith.constant 0 : index
    %23 = vector.load %arg2[%c0_24, %c0_25] : memref<16x16xf32, #tpu.memory_space<vmem>>, vector<16x16xf32>
    %24 = vector.extract_strided_slice %4 {offsets = [48, 0], sizes = [16, 16], strides = [1, 1]} : vector<64x16xf32> to vector<16x16xf32>
    %cst_26 = arith.constant dense<0.000000e+00> : vector<16x16xf32>
    %25 = tpu.matmul %23, %24, %cst_26 {dimension_numbers = #tpu.dot_dimension_numbers<[1], [0], [0], [1], [0, 0, 1, 1], [], []>} : vector<16x16xf32>, vector<16x16xf32>, vector<16x16xf32> -> vector<16x16xf32>
    %c0_27 = arith.constant 0 : index
    %c3 = arith.constant 3 : index
    %c0_28 = arith.constant 0 : index
    %c0_29 = arith.constant 0 : index
    %26 = vector.load %arg4[%c0_27, %c3, %c0_28, %c0_29] : memref<1x4x16x16xf32, #tpu.memory_space<vmem>>, vector<1x1x16x16xf32>
    %27 = vector.shape_cast %26 : vector<1x1x16x16xf32> to vector<16x16xf32>
    %28 = vector.shape_cast %25 : vector<16x16xf32> to vector<1x1x16x16xf32>
    tpu.vector_store %arg4[%c0_27, %c3, %c0_28, %c0_29], %28 {strides = array<i32>} : memref<1x4x16x16xf32, #tpu.memory_space<vmem>>, vector<1x1x16x16xf32>,
    return
  }
  func.func @transform_0(%arg0: i32) -> (i32, i32, i32, i32) {
    %c0_i32 = arith.constant 0 : i32
    %c0_i32_0 = arith.constant 0 : i32
    %c0_i32_1 = arith.constant 0 : i32
    %c0_i32_2 = arith.constant 0 : i32
    return %arg0, %c0_i32, %c0_i32_0, %c0_i32_1 : i32, i32, i32, i32
  }
  func.func @transform_1(%arg0: i32) -> (i32, i32) {
    %c0_i32 = arith.constant 0 : i32
    %c0_i32_0 = arith.constant 0 : i32
    %c0_i32_1 = arith.constant 0 : i32
    return %c0_i32, %c0_i32_0 : i32, i32
  }
  func.func @transform_2(%arg0: i32) -> (i32, i32) {
    %c0_i32 = arith.constant 0 : i32
    %c0_i32_0 = arith.constant 0 : i32
    %c0_i32_1 = arith.constant 0 : i32
    return %c0_i32, %c0_i32_0 : i32, i32
  }
  func.func @transform_3(%arg0: i32) -> (i32, i32, i32, i32) {
    %c0_i32 = arith.constant 0 : i32
    %c0_i32_0 = arith.constant 0 : i32
    %c0_i32_1 = arith.constant 0 : i32
    %c0_i32_2 = arith.constant 0 : i32
    return %arg0, %c0_i32, %c0_i32_0, %c0_i32_1 : i32, i32, i32, i32
  }
}

</mosaic_0001>

<llo_original>
// kernel: tpu_custom_call.1
$region0: #{tpu_custom_call.1}
  #allocation0 [shape = 'u32[]', space=smem, size = 0x4, offset = 0x4, fixed_abs, tag = 'smem constant byte address 0x4 - core index']
  #allocation1 [shape = 'u32[72,128]{1,0:T(1,128)}', space=vmem, size = 0x9000, scoped, tag = 'internal scratch']
  %s0 = inlined_call_operand.hbm [shape: f32[2,4,16,16], index: 0, kind: input, shape index: {}]
  %s1 = inlined_call_operand.hbm [shape: f32[16,16], index: 1, kind: input, shape index: {}]
  %s2 = inlined_call_operand.hbm [shape: f32[16,16], index: 2, kind: input, shape index: {}]
  %s3 = inlined_call_operand.hbm [shape: f32[2,4,16,16], index: 3, kind: output, shape index: {}]
  %s4 = sld [smem:[#allocation0]]
  $region57: #{tpu_custom_call.1} parent=0
    _
  %s6 = ssub.s32 1, %s4
  %s7 = scalar_select 0, %s6, %s4
  $region1: #{tpu_custom_call.1} parent=0
    #allocation2 [shape = 'u8[65536]{0}', space=vmem, size = 0x10000, scoped, tag = 'input window, operand 0']
    #allocation3 [shape = 's32[2]{0}', space=sflag, size = 0x8, scoped, tag = 'scoped memory for tpu_custom_call.1']
    #allocation4 [shape = 's32[2]{0}', space=sflag, size = 0x8, scoped, tag = 'scoped memory for tpu_custom_call.1']
    #allocation5 [shape = 'u8[8192]{0}', space=vmem, size = 0x2000, scoped, tag = 'input window, operand 1, single buffered']
    #allocation6 [shape = 's32[1]{0}', space=sflag, size = 0x4, scoped, tag = 'scoped memory for tpu_custom_call.1']
    #allocation7 [shape = 'u8[8192]{0}', space=vmem, size = 0x2000, scoped, tag = 'input window, operand 2, single buffered']
    #allocation8 [shape = 'u8[65536]{0}', space=vmem, size = 0x10000, scoped, tag = 'output window, operand 0']
    %8 = vsyncpa [#allocation3], 0
    %s9 = scalar_lea.sflag [#allocation3], 1
    %10 = vsyncpa %s9, 0
    %11 = vsyncpa [#allocation6], 0
    %12 = vsyncpa [#allocation4], 0
    %s13 = scalar_lea.sflag [#allocation4], 1
    %14 = vsyncpa %s13, 0
    loop: start=0, step=1, limit=4
    $region2: #{tpu_custom_call.1} parent=1 // loop_pre_header
      _
    $region3: #{tpu_custom_call.1} parent=1 // loop_header
      %s16 = sphi 0, %s20
      %p17 = scmp.ge.s32.totalorder %s16, 4
      %s26 = sphi 0, %s28
      %s29 = sphi 0, %s26
      %s30 = sphi 0, %s29
      %s46 = sphi 0, %s30
      %s50 = sphi 0, %s50
      %s52 = sphi 0, %s50
      %s53 = sphi 0, %s52
      %s67 = sphi 0, %s53
      %s71 = sphi 0, %s71
      %s73 = sphi 0, %s71
      %s74 = sphi 0, %s73
      %s88 = sphi 0, %s74
      %s94 = sphi 0, %s96
      %s97 = sphi 0, %s94
      %s98 = sphi 0, %s97
      %s114 = sphi 0, %s98
    $region4: #{tpu_custom_call.1} parent=1 // loop_header_branch
      %19 = sbr.rel (%p17) target = $region8
    $region5: #{tpu_custom_call.1} parent=1 // loop_body
      %s21 = ssub.s32 %s16, 1
      %s22 = ssub.s32 %s16, 2
      %s23 = sadd.s32 %s16, 1
      %s24 = ssub.s32 %s16, %s23
      %p25 = scmp.eq.s32.totalorder %s24, 0
      %s27 = sadd.s32 %s26, 1
      %s28 = scalar_select %p25, %s26, %s27
      %p31 = pneg %p25
      %p32 = scmp.eq.s32.totalorder %s16, 1
      %p33 = por %p31, %p32
      %p34 = scmp.ne.s32.totalorder %s26, %s29
      %p35 = scmp.eq.s32.totalorder %s16, 0
      %p36 = por %p34, %p35
      %p37 = scmp.ne.s32.totalorder %s26, %s29
      %p38 = scmp.eq.s32.totalorder %s21, 1
      %p39 = por %p37, %p38
      %p40 = scmp.ne.s32.totalorder %s29, %s30
      %p41 = scmp.eq.s32.totalorder %s21, 0
      %p42 = por %p40, %p41
      %p43 = scmp.ne.s32.totalorder %s29, %s30
      %p44 = scmp.eq.s32.totalorder %s22, 1
      %p45 = por %p43, %p44
      %p47 = scmp.ne.s32.totalorder %s30, %s46
      %p48 = scmp.eq.s32.totalorder %s22, 0
      %p49 = por %p47, %p48
      %s51 = sadd.s32 %s50, 1
      %p54 = scmp.eq.s32.totalorder %s16, 1
      %p55 = scmp.ne.s32.totalorder %s50, %s52
      %p56 = scmp.eq.s32.totalorder %s16, 0
      %p57 = por %p55, %p56
      %p58 = scmp.ne.s32.totalorder %s50, %s52
      %p59 = scmp.eq.s32.totalorder %s21, 1
      %p60 = por %p58, %p59
      %p61 = scmp.ne.s32.totalorder %s52, %s53
      %p62 = scmp.eq.s32.totalorder %s21, 0
      %p63 = por %p61, %p62
      %p64 = scmp.ne.s32.totalorder %s52, %s53
      %p65 = scmp.eq.s32.totalorder %s22, 1
      %p66 = por %p64, %p65
      %p68 = scmp.ne.s32.totalorder %s53, %s67
      %p69 = scmp.eq.s32.totalorder %s22, 0
      %p70 = por %p68, %p69
      %s72 = sadd.s32 %s71, 1
      %p75 = scmp.eq.s32.totalorder %s16, 1
      %p76 = scmp.ne.s32.totalorder %s71, %s73
      %p77 = scmp.eq.s32.totalorder %s16, 0
      %p78 = por %p76, %p77
      %p79 = scmp.ne.s32.totalorder %s71, %s73
      %p80 = scmp.eq.s32.totalorder %s21, 1
      %p81 = por %p79, %p80
      %p82 = scmp.ne.s32.totalorder %s73, %s74
      %p83 = scmp.eq.s32.totalorder %s21, 0
      %p84 = por %p82, %p83
      %p85 = scmp.ne.s32.totalorder %s73, %s74
      %p86 = scmp.eq.s32.totalorder %s22, 1
      %p87 = por %p85, %p86
      %p89 = scmp.ne.s32.totalorder %s74, %s88
      %p90 = scmp.eq.s32.totalorder %s22, 0
      %p91 = por %p89, %p90
      %s92 = ssub.s32 %s16, %s23
      %p93 = scmp.eq.s32.totalorder %s92, 0
      %s95 = sadd.s32 %s94, 1
      %s96 = scalar_select %p93, %s94, %s95
      %p99 = pneg %p93
      %p100 = scmp.eq.s32.totalorder %s16, 1
      %p101 = por %p99, %p100
      %p102 = scmp.ne.s32.totalorder %s94, %s97
      %p103 = scmp.eq.s32.totalorder %s16, 0
      %p104 = por %p102, %p103
      %p105 = scmp.ne.s32.totalorder %s94, %s97
      %p106 = scmp.eq.s32.totalorder %s21, 1
      %p107 = por %p105, %p106
      %p108 = scmp.ne.s32.totalorder %s97, %s98
      %p109 = scmp.eq.s32.totalorder %s21, 0
      %p110 = por %p108, %p109
      %p111 = scmp.ne.s32.totalorder %s97, %s98
      %p112 = scmp.eq.s32.totalorder %s22, 1
      %p113 = por %p111, %p112
      %p115 = scmp.ne.s32.totalorder %s98, %s114
      %p116 = scmp.eq.s32.totalorder %s22, 0
      %p117 = por %p115, %p116
      %p118 = scmp.le.s32.totalorder 1, %s16
      %p119 = scmp.lt.s32.totalorder %s16, 3
      %p120 = pnand %p118, %p119
      %p121 = pneg %p120
      // Predicated region
      $region9: #{tpu_custom_call.1} parent=5 // pred_check
        _
      $region10: #{tpu_custom_call.1} parent=5 // pred_check_branch
        %123 = sbr.rel (%p120) target = $region12
      $region11: #{tpu_custom_call.1} parent=5 // pred_region
        %s124 = ssub.s32 %s16, 1
        // Predicated region
        $region13: #{tpu_custom_call.1} parent=11 // pred_check
          %p125 = pneg %p63
        $region14: #{tpu_custom_call.1} parent=11 // pred_check_branch
          %127 = sbr.rel (%p125) target = $region16
        $region15: #{tpu_custom_call.1} parent=11 // pred_region
          %129 = vsyncadd [#allocation6], 0
          %s130 = sshll.u32 %s1, 4
          %s131 = int_to_ptr.hbm [resolvable:$true] %s130
          %s132 = sshll.u32 [#allocation5], 4
          %s133 = int_to_ptr.vmem [resolvable:$true] %s132
          %138 = dma.hbm_to_vmem [thread:$0]  %s131, 256, %s133, [#allocation6], 128, 128, 8
        $region16: #{tpu_custom_call.1} parent=11 // pred_fallthru
          _
        // Predicated region
        $region17: #{tpu_custom_call.1} parent=11 // pred_check
          %p139 = pneg %p84
        $region18: #{tpu_custom_call.1} parent=11 // pred_check_branch
          %141 = sbr.rel (%p139) target = $region20
        $region19: #{tpu_custom_call.1} parent=11 // pred_region
          %143 = vsyncadd [#allocation6], 0
          %s144 = sshll.u32 %s2, 4
          %s145 = int_to_ptr.hbm [resolvable:$true] %s144
          %s146 = sshll.u32 [#allocation7], 4
          %s147 = int_to_ptr.vmem [resolvable:$true] %s146
          %152 = dma.hbm_to_vmem [thread:$0]  %s145, 256, %s147, [#allocation6], 128, 128, 8
        $region20: #{tpu_custom_call.1} parent=11 // pred_fallthru
          _
      $region12: #{tpu_custom_call.1} parent=5 // pred_fallthru
        _
      %p153 = scmp.lt.s32.totalorder %s16, 2
      // Predicated region
      $region21: #{tpu_custom_call.1} parent=5 // pred_check
        %p154 = pneg %p153
      $region22: #{tpu_custom_call.1} parent=5 // pred_check_branch
        %156 = sbr.rel (%p154) target = $region24
      $region23: #{tpu_custom_call.1} parent=5 // pred_region
        // Predicated region
        $region25: #{tpu_custom_call.1} parent=23 // pred_check
          %p157 = pneg %p36
        $region26: #{tpu_custom_call.1} parent=23 // pred_check_branch
          %159 = sbr.rel (%p157) target = $region28
        $region27: #{tpu_custom_call.1} parent=23 // pred_region
          %s160 = sand.u32 %s26, 1
          %s161 = scalar_lea.sflag [#allocation3], %s160
          %s162 = sand.u32 %s26, 1
          %s163 = smul.addr %s162, 64
          %s164 = scalar_lea.vmem [#allocation2], %s163
          %166 = vsyncadd %s161, 0
          %s167 = smul.addr %s16, 8
          %s168 = smul.addr %s167, 8
          %s169 = scalar_lea.hbm %s0, %s168
          %s170 = sshll.u32 %s169, 4
          %s171 = int_to_ptr.hbm [resolvable:$true] %s170
          %s172 = sshll.u32 %s164, 4
          %s173 = int_to_ptr.vmem [resolvable:$true] %s172
          %178 = dma.hbm_to_vmem [thread:$0]  %s171, 1024, %s173, %s161, 128, 128, 8
        $region28: #{tpu_custom_call.1} parent=23 // pred_fallthru
          _
      $region24: #{tpu_custom_call.1} parent=5 // pred_fallthru
        _
      %p179 = scmp.le.s32.totalorder 1, %s16
      %p180 = scmp.lt.s32.totalorder %s16, 3
      %p181 = pnand %p179, %p180
      %p182 = pneg %p181
      // Predicated region
      $region29: #{tpu_custom_call.1} parent=5 // pred_check
        _
      $region30: #{tpu_custom_call.1} parent=5 // pred_check_branch
        %184 = sbr.rel (%p181) target = $region32
      $region31: #{tpu_custom_call.1} parent=5 // pred_region
        %s185 = ssub.s32 %s16, 1
        %s186 = sand.u32 %s29, 1
        %s187 = scalar_lea.sflag [#allocation3], %s186
        %s188 = sand.u32 %s29, 1
        %s189 = smul.addr %s188, 64
        %s190 = scalar_lea.vmem [#allocation2], %s189
        // Predicated region
        $region33: #{tpu_custom_call.1} parent=31 // pred_check
          %p191 = pneg %p42
        $region34: #{tpu_custom_call.1} parent=31 // pred_check_branch
          %193 = sbr.rel (%p191) target = $region36
        $region35: #{tpu_custom_call.1} parent=31 // pred_region
          %195 = dma.done %s187, 1024
        $region36: #{tpu_custom_call.1} parent=31 // pred_fallthru
          _
        // Predicated region
        $region37: #{tpu_custom_call.1} parent=31 // pred_check
          %p196 = pneg %p63
        $region38: #{tpu_custom_call.1} parent=31 // pred_check_branch
          %198 = sbr.rel (%p196) target = $region40
        $region39: #{tpu_custom_call.1} parent=31 // pred_region
          %200 = dma.done [#allocation6], 256
        $region40: #{tpu_custom_call.1} parent=31 // pred_fallthru
          _
        // Predicated region
        $region41: #{tpu_custom_call.1} parent=31 // pred_check
          %p201 = pneg %p84
        $region42: #{tpu_custom_call.1} parent=31 // pred_check_branch
          %203 = sbr.rel (%p201) target = $region44
        $region43: #{tpu_custom_call.1} parent=31 // pred_region
          %205 = dma.done [#allocation6], 256
        $region44: #{tpu_custom_call.1} parent=31 // pred_fallthru
          _
        %s206 = sand.u32 %s29, 1
        %s207 = scalar_lea.sflag [#allocation3], %s206
        %s208 = sand.u32 %s29, 1
        %s209 = smul.addr %s208, 64
        %s210 = scalar_lea.vmem [#allocation2], %s209
        %p211 = pneg %p42
        %p212 = pneg %p39
        %p213 = pneg %p63
        %p214 = pneg %p60
        %p215 = pneg %p84
        %p216 = pneg %p81
        %p217 = pneg %p110
        %p218 = pneg %p107
        %s219 = sand.u32 %s97, 1
        %s220 = scalar_lea.sflag [#allocation4], %s219
        %s221 = sand.u32 %s97, 1
        %s222 = smul.addr %s221, 64
        %s223 = scalar_lea.vmem [#allocation8], %s222
        %v224 = vld [vmem:[%s190] sm:$0xff]
        %v225 = vld [vmem:[%s190 + $0x8] sm:$0xff]
        %v226 = vld [vmem:[%s190 + $0x10] sm:$0xff]
        %v227 = vld [vmem:[%s190 + $0x18] sm:$0xff]
        %v228 = vld [vmem:[%s190 + $0x20] sm:$0xff]
        %v229 = vld [vmem:[%s190 + $0x28] sm:$0xff]
        %v230 = vld [vmem:[%s190 + $0x30] sm:$0xff]
        %v231 = vld [vmem:[%s190 + $0x38] sm:$0xff]
        %v232 = vld [vmem:[#allocation7] sm:$0xff]
        %v233 = vld [vmem:[#allocation7 + $0x8] sm:$0xff]
        %vm234 = vcmask 130048
        %v236 = vsel %vm234, %v224, 0
        %v239 = vsel %vm234, %v225, 0
        %v242 = vsel %vm234, %v226, 0
        %v245 = vsel %vm234, %v227, 0
        %v248 = vsel %vm234, %v228, 0
        %v251 = vsel %vm234, %v229, 0
        %v254 = vsel %vm234, %v230, 0
        %v257 = vsel %vm234, %v231, 0
        %259 = vmatpush.msra.mxu0 0.0
        %260 = vmatpush.msra.mxu0 0.0
        %261 = vmatpush.msra.mxu0 0.0
        %262 = vmatpush.msra.mxu0 0.0
        %263 = vmatpush.msra.mxu0 0.0
        %264 = vmatpush.msra.mxu0 0.0
        %265 = vmatpush.msra.mxu0 0.0
        %266 = vmatpush.msra.mxu0 0.0
        %267 = vmatpush.msra.mxu0 0.0
        %268 = vmatpush.msra.mxu0 0.0
        %269 = vmatpush.msra.mxu0 0.0
        %270 = vmatpush.msra.mxu0 0.0
        %271 = vmatpush.msra.mxu0 0.0
        %272 = vmatpush.msra.mxu0 0.0
        %273 = vmatpush.msra.mxu0 %v233
        %274 = vmatpush.msra.mxu0 %v232
        %275 = vmatmul.f32.gmra.mxu0 %v236
        %v276 = vpop.f32.mrf.mxu0
        %v277 = vadd.f32 0.0, %v276
        %278 = vmatmul.f32.gmra.mxu0 %v239
        %v279 = vpop.f32.mrf.mxu0
        %v280 = vadd.f32 0.0, %v279
        %281 = vmatmul.f32.gmra.mxu0 %v242
        %v282 = vpop.f32.mrf.mxu0
        %v283 = vadd.f32 0.0, %v282
        %284 = vmatmul.f32.gmra.mxu0 %v245
        %v285 = vpop.f32.mrf.mxu0
        %v286 = vadd.f32 0.0, %v285
        %287 = vmatmul.f32.gmra.mxu0 %v248
        %v288 = vpop.f32.mrf.mxu0
        %v289 = vadd.f32 0.0, %v288
        %290 = vmatmul.f32.gmra.mxu0 %v251
        %v291 = vpop.f32.mrf.mxu0
        %v292 = vadd.f32 0.0, %v291
        %293 = vmatmul.f32.gmra.mxu0 %v254
        %v294 = vpop.f32.mrf.mxu0
        %v295 = vadd.f32 0.0, %v294
        %296 = vmatmul.f32.gmra.mxu0 %v257
        %v297 = vpop.f32.mrf.mxu0
        %v298 = vadd.f32 0.0, %v297
        %299 = vdwg.mxu0
        %v300 = vld [vmem:[#allocation5] sm:$0xff]
        %v301 = vld [vmem:[#allocation5 + $0x8] sm:$0xff]
        %v303 = vsel %vm234, %v300, 0
        %v306 = vsel %vm234, %v301, 0
        %308 = vmatpush.msra.mxu0 0.0
        %309 = vmatpush.msra.mxu0 0.0
        %310 = vmatpush.msra.mxu0 0.0
        %311 = vmatpush.msra.mxu0 0.0
        %312 = vmatpush.msra.mxu0 0.0
        %313 = vmatpush.msra.mxu0 0.0
        %314 = vmatpush.msra.mxu0 0.0
        %315 = vmatpush.msra.mxu0 0.0
        %316 = vmatpush.msra.mxu0 0.0
        %317 = vmatpush.msra.mxu0 0.0
        %318 = vmatpush.msra.mxu0 0.0
        %319 = vmatpush.msra.mxu0 0.0
        %320 = vmatpush.msra.mxu0 0.0
        %321 = vmatpush.msra.mxu0 0.0
        %322 = vmatpush.msra.mxu0 %v280
        %323 = vmatpush.msra.mxu0 %v277
        %324 = vmatmul.f32.gmra.mxu0 %v303
        %v325 = vpop.f32.mrf.mxu0
        %v326 = vadd.f32 0.0, %v325
        %327 = vmatmul.f32.gmra.mxu0 %v306
        %v328 = vpop.f32.mrf.mxu0
        %v329 = vadd.f32 0.0, %v328
        %330 = vdwg.mxu0
        %331 = vst.msk [vmem:[%s223] sm:$0xff] %vm234, %v326
        %332 = vst.msk [vmem:[%s223 + $0x8] sm:$0xff] %vm234, %v329
        %v333 = vld [vmem:[#allocation5] sm:$0xff]
        %v334 = vld [vmem:[#allocation5 + $0x8] sm:$0xff]
        %v336 = vsel %vm234, %v333, 0
        %v339 = vsel %vm234, %v334, 0
        %341 = vmatpush.msra.mxu0 0.0
        %342 = vmatpush.msra.mxu0 0.0
        %343 = vmatpush.msra.mxu0 0.0
        %344 = vmatpush.msra.mxu0 0.0
        %345 = vmatpush.msra.mxu0 0.0
        %346 = vmatpush.msra.mxu0 0.0
        %347 = vmatpush.msra.mxu0 0.0
        %348 = vmatpush.msra.mxu0 0.0
        %349 = vmatpush.msra.mxu0 0.0
        %350 = vmatpush.msra.mxu0 0.0
        %351 = vmatpush.msra.mxu0 0.0
        %352 = vmatpush.msra.mxu0 0.0
        %353 = vmatpush.msra.mxu0 0.0
        %354 = vmatpush.msra.mxu0 0.0
        %355 = vmatpush.msra.mxu0 %v286
        %356 = vmatpush.msra.mxu0 %v283
        %357 = vmatmul.f32.gmra.mxu0 %v336
        %v358 = vpop.f32.mrf.mxu0
        %v359 = vadd.f32 0.0, %v358
        %360 = vmatmul.f32.gmra.mxu0 %v339
        %v361 = vpop.f32.mrf.mxu0
        %v362 = vadd.f32 0.0, %v361
        %363 = vdwg.mxu0
        %s364 = scalar_lea.vmem %s223, 16 [#allocation8]
        %365 = vst.msk [vmem:[%s364] sm:$0xff] %vm234, %v359
        %366 = vst.msk [vmem:[%s364 + $0x8] sm:$0xff] %vm234, %v362
        %v367 = vld [vmem:[#allocation5] sm:$0xff]
        %v368 = vld [vmem:[#allocation5 + $0x8] sm:$0xff]
        %v370 = vsel %vm234, %v367, 0
        %v373 = vsel %vm234, %v368, 0
        %375 = vmatpush.msra.mxu0 0.0
        %376 = vmatpush.msra.mxu0 0.0
        %377 = vmatpush.msra.mxu0 0.0
        %378 = vmatpush.msra.mxu0 0.0
        %379 = vmatpush.msra.mxu0 0.0
        %380 = vmatpush.msra.mxu0 0.0
        %381 = vmatpush.msra.mxu0 0.0
        %382 = vmatpush.msra.mxu0 0.0
        %383 = vmatpush.msra.mxu0 0.0
        %384 = vmatpush.msra.mxu0 0.0
        %385 = vmatpush.msra.mxu0 0.0
        %386 = vmatpush.msra.mxu0 0.0
        %387 = vmatpush.msra.mxu0 0.0
        %388 = vmatpush.msra.mxu0 0.0
        %389 = vmatpush.msra.mxu0 %v292
        %390 = vmatpush.msra.mxu0 %v289
        %391 = vmatmul.f32.gmra.mxu0 %v370
        %v392 = vpop.f32.mrf.mxu0
        %v393 = vadd.f32 0.0, %v392
        %394 = vmatmul.f32.gmra.mxu0 %v373
        %v395 = vpop.f32.mrf.mxu0
        %v396 = vadd.f32 0.0, %v395
        %397 = vdwg.mxu0
        %s398 = scalar_lea.vmem %s223, 32 [#allocation8]
        %399 = vst.msk [vmem:[%s398] sm:$0xff] %vm234, %v393
        %400 = vst.msk [vmem:[%s398 + $0x8] sm:$0xff] %vm234, %v396
        %v401 = vld [vmem:[#allocation5] sm:$0xff]
        %v402 = vld [vmem:[#allocation5 + $0x8] sm:$0xff]
        %v404 = vsel %vm234, %v401, 0
        %v407 = vsel %vm234, %v402, 0
        %409 = vmatpush.msra.mxu0 0.0
        %410 = vmatpush.msra.mxu0 0.0
        %411 = vmatpush.msra.mxu0 0.0
        %412 = vmatpush.msra.mxu0 0.0
        %413 = vmatpush.msra.mxu0 0.0
        %414 = vmatpush.msra.mxu0 0.0
        %415 = vmatpush.msra.mxu0 0.0
        %416 = vmatpush.msra.mxu0 0.0
        %417 = vmatpush.msra.mxu0 0.0
        %418 = vmatpush.msra.mxu0 0.0
        %419 = vmatpush.msra.mxu0 0.0
        %420 = vmatpush.msra.mxu0 0.0
        %421 = vmatpush.msra.mxu0 0.0
        %422 = vmatpush.msra.mxu0 0.0
        %423 = vmatpush.msra.mxu0 %v298
        %424 = vmatpush.msra.mxu0 %v295
        %425 = vmatmul.f32.gmra.mxu0 %v404
        %v426 = vpop.f32.mrf.mxu0
        %v427 = vadd.f32 0.0, %v426
        %428 = vmatmul.f32.gmra.mxu0 %v407
        %v429 = vpop.f32.mrf.mxu0
        %v430 = vadd.f32 0.0, %v429
        %431 = vdwg.mxu0
        %s432 = scalar_lea.vmem %s223, 48 [#allocation8]
        %433 = vst.msk [vmem:[%s432] sm:$0xff] %vm234, %v427
        %434 = vst.msk [vmem:[%s432 + $0x8] sm:$0xff] %vm234, %v430
        %s435 = sand.u32 %s97, 1
        %s436 = scalar_lea.sflag [#allocation4], %s435
        %s437 = sand.u32 %s97, 1
        %s438 = smul.addr %s437, 64
        %s439 = scalar_lea.vmem [#allocation8], %s438
        // Predicated region
        $region45: #{tpu_custom_call.1} parent=31 // pred_check
          %p440 = pneg %p107
        $region46: #{tpu_custom_call.1} parent=31 // pred_check_branch
          %442 = sbr.rel (%p440) target = $region48
        $region47: #{tpu_custom_call.1} parent=31 // pred_region
          %444 = vsyncadd %s436, 0
          %s445 = smul.addr %s21, 8
          %s446 = smul.addr %s445, 8
          %s447 = scalar_lea.hbm %s3, %s446
          %s448 = sshll.u32 %s439, 4
          %s449 = int_to_ptr.vmem [resolvable:$true] %s448
          %s450 = sshll.u32 %s447, 4
          %s451 = int_to_ptr.hbm [resolvable:$true] %s450
          %456 = dma.vmem_to_hbm [thread:$0]  %s449, 1024, %s451, %s436, 128, 128, 8
        $region48: #{tpu_custom_call.1} parent=31 // pred_fallthru
          _
      $region32: #{tpu_custom_call.1} parent=5 // pred_fallthru
        _
      %p457 = scmp.le.s32.totalorder 2, %s16
      // Predicated region
      $region49: #{tpu_custom_call.1} parent=5 // pred_check
        %p458 = pneg %p457
      $region50: #{tpu_custom_call.1} parent=5 // pred_check_branch
        %460 = sbr.rel (%p458) target = $region52
      $region51: #{tpu_custom_call.1} parent=5 // pred_region
        %s461 = ssub.s32 %s16, 2
        // Predicated region
        $region53: #{tpu_custom_call.1} parent=51 // pred_check
          %p462 = pneg %p113
        $region54: #{tpu_custom_call.1} parent=51 // pred_check_branch
          %464 = sbr.rel (%p462) target = $region56
        $region55: #{tpu_custom_call.1} parent=51 // pred_region
          %s465 = sand.u32 %s98, 1
          %s466 = scalar_lea.sflag [#allocation4], %s465
          %s467 = sand.u32 %s98, 1
          %s468 = smul.addr %s467, 64
          %s469 = scalar_lea.vmem [#allocation8], %s468
          %471 = dma.done %s466, 1024
        $region56: #{tpu_custom_call.1} parent=51 // pred_fallthru
          _
      $region52: #{tpu_custom_call.1} parent=5 // pred_fallthru
        _
    $region6: #{tpu_custom_call.1} parent=1 // loop_footer
      %s20 = sadd.s32 1, %s16
    $region7: #{tpu_custom_call.1} parent=1 // loop_footer_branch
      %15 = sbr.rel target = $region3
    $region8: #{tpu_custom_call.1} parent=1 // loop_exit
      _
    %472 = vsyncpa [#allocation3], 1
    %s473 = scalar_lea.sflag [#allocation3], 1
    %474 = vsyncpa %s473, 1
    %475 = vsyncpa [#allocation6], 1
    %476 = vsyncpa [#allocation4], 1
    %s477 = scalar_lea.sflag [#allocation4], 1
    %478 = vsyncpa %s477, 1

</llo_original>
